<compile_context>
chip_gen: v5e
topology: v5e:2x2
jax: 0.10.0
libtpu: 0.0.40
codegen_flags: <defaults>
</compile_context>

<pallas_src>
import jax
import jax.numpy as jnp
from jax.experimental import pallas as pl
from jax.experimental.pallas import tpu as pltpu

BN_EPS = 1e-5
LANE = 128


def _round_up(x, m):
    return (x + m - 1) // m * m


# -----------------------------------------------------------------------------
# Kernel
# -----------------------------------------------------------------------------
def generator_kernel(noise_ref, w1, w2, w3, w4, w5, aux_ref, out_ref):
    """Fused generator forward. Weights are bf16 (in, out); aux packs
    [g1, be1, g2, be2, g3, be3, g4, be4, b5] rows (f32, lane-padded)."""
    n = noise_ref.shape[0]
    inv_n = 1.0 / n

    def block(x_bf16, w_ref, aux_row):
        d = w_ref.shape[1]
        # Linear (bias omitted: it cancels exactly under batch-stat BatchNorm).
        y = jnp.dot(x_bf16, w_ref[...], preferred_element_type=jnp.float32)
        # One-pass batch statistics (biased variance, as PyTorch training-mode BN).
        mean = jnp.sum(y, axis=0, keepdims=True) * inv_n
        mean_sq = jnp.sum(y * y, axis=0, keepdims=True) * inv_n
        var = jnp.maximum(mean_sq - mean * mean, 0.0)
        gamma = aux_ref[aux_row:aux_row + 1, :d]
        beta = aux_ref[aux_row + 1:aux_row + 2, :d]
        # Folded BN (scale+shift) + ReLU.  rsqrt rides the EUP slot.
        a = gamma * jax.lax.rsqrt(var + BN_EPS)
        c = beta - mean * a
        y = jnp.maximum(y * a + c, 0.0)
        return y.astype(jnp.bfloat16)  # bf16 feed for the next MXU matmul

    x = noise_ref[...].astype(jnp.bfloat16)
    x = block(x, w1, 0)
    x = block(x, w2, 2)
    x = block(x, w3, 4)
    x = block(x, w4, 6)

    d_out = w5.shape[1]
    y = jnp.dot(x, w5[...], preferred_element_type=jnp.float32)
    y = y + aux_ref[8:9, :d_out]
    # Sigmoid with the divide kept on the EUP (approx reciprocal).
    out_ref[...] = pl.reciprocal(1.0 + jnp.exp(-y), approx=True)


# -----------------------------------------------------------------------------
# Wrapper: pad/pack PyTorch-layout params and call the kernel.
# -----------------------------------------------------------------------------
def generator_forward(noise, params):
    """noise: (N, z_dim) f32.
    params: flat list [w1,b1,g1,be1, ..., w4,b4,g4,be4, w5,b5];
            weights are (in, out), vectors are (1, out)  (PyTorch x @ W.T + b layout
            already transposed to (in, out))."""
    n, z_dim = noise.shape
    ws = [params[4 * i] for i in range(4)] + [params[-2]]
    gammas = [params[4 * i + 2] for i in range(4)]
    betas = [params[4 * i + 3] for i in range(4)]
    b5 = params[-1]

    dims = [z_dim] + [int(w.shape[1]) for w in ws]
    pdims = [_round_up(d, LANE) for d in dims]
    w_max = max(pdims[1:])
    im_dim = dims[-1]

    # Lane-pad weights with zeros and cast to bf16 (zero pad rows/cols are inert).
    w_pad = []
    for i, w in enumerate(ws):
        wp = jnp.zeros((pdims[i], pdims[i + 1]), jnp.bfloat16)
        wp = wp.at[: dims[i], : dims[i + 1]].set(w.astype(jnp.bfloat16))
        w_pad.append(wp)

    # Pack gamma/beta (x4) + final bias into a single (9, w_max) f32 array.
    # Padded gamma columns are 0 -> padded BN outputs are exactly 0 (no NaNs).
    aux = jnp.zeros((9, w_max), jnp.float32)
    for i in range(4):
        aux = aux.at[2 * i, : dims[i + 1]].set(gammas[i].reshape(-1))
        aux = aux.at[2 * i + 1, : dims[i + 1]].set(betas[i].reshape(-1))
    aux = aux.at[8, : dims[5]].set(b5.reshape(-1))

    # Lane-pad the noise (padded weight rows are zero, so no effect on the result).
    noise_p = jnp.zeros((n, pdims[0]), jnp.float32).at[:, :z_dim].set(noise)

    vmem_spec = pl.BlockSpec(memory_space=pltpu.MemorySpace.VMEM)
    out_p = pl.pallas_call(
        generator_kernel,
        out_shape=jax.ShapeDtypeStruct((n, pdims[-1]), jnp.float32),
        in_specs=[vmem_spec] * 7,
        out_specs=vmem_spec,
        compiler_params=pltpu.CompilerParams(
            vmem_limit_bytes=48 * 1024 * 1024),  # fits v7x's 64 MiB physical VMEM
    )(noise_p, *w_pad, aux)
    return out_p[:, :im_dim]


# -----------------------------------------------------------------------------
# Param init (PyTorch defaults) and pure-JAX references.
# -----------------------------------------------------------------------------
def init_params(key, z_dim, im_dim, hidden_dim):
    """Uniform +/- 1/sqrt(fan_in) for Linear, BN gamma=1 / beta=0."""
    dims = [z_dim, hidden_dim, hidden_dim * 2, hidden_dim * 4, hidden_dim * 8, im_dim]
    params = []
    for i in range(4):
        fan_in, fan_out = dims[i], dims[i + 1]
        key, kw, kb = jax.random.split(key, 3)
        bound = 1.0 / (fan_in ** 0.5)
        params += [
            jax.random.uniform(kw, (fan_in, fan_out), jnp.float32, -bound, bound),
            jax.random.uniform(kb, (1, fan_out), jnp.float32, -bound, bound),
            jnp.ones((1, fan_out), jnp.float32),
            jnp.zeros((1, fan_out), jnp.float32),
        ]
    fan_in, fan_out = dims[4], dims[5]
    key, kw, kb = jax.random.split(key, 3)
    bound = 1.0 / (fan_in ** 0.5)
    params += [
        jax.random.uniform(kw, (fan_in, fan_out), jnp.float32, -bound, bound),
        jax.random.uniform(kb, (1, fan_out), jnp.float32, -bound, bound),
    ]
    return params


def reference_forward_f32(noise, params):
    """Exact PyTorch-semantics reference in f32 (training-mode BN, biased var)."""
    x = noise
    for i in range(4):
        w, b, g, be = params[4 * i: 4 * i + 4]
        y = x @ w + b
        mean = jnp.mean(y, axis=0, keepdims=True)
        var = jnp.mean((y - mean) ** 2, axis=0, keepdims=True)
        y = (y - mean) * jax.lax.rsqrt(var + BN_EPS) * g + be
        x = jnp.maximum(y, 0.0)
    w5, b5 = params[-2], params[-1]
    return jax.nn.sigmoid(x @ w5 + b5)


def reference_forward_matched(noise, params):
    """Pure-JAX reference mirroring the kernel's dtype strategy (bf16 matmul inputs,
    f32 accumulation/epilogue, folded BN, bias cancellation) for a tight check."""
    x = noise.astype(jnp.bfloat16)
    for i in range(4):
        w, _, g, be = params[4 * i: 4 * i + 4]
        y = jnp.dot(x, w.astype(jnp.bfloat16), preferred_element_type=jnp.float32)
        mean = jnp.mean(y, axis=0, keepdims=True)
        var = jnp.maximum(jnp.mean(y * y, axis=0, keepdims=True) - mean * mean, 0.0)
        a = g * jax.lax.rsqrt(var + BN_EPS)
        x = jnp.maximum(y * a + (be - mean * a), 0.0).astype(jnp.bfloat16)
    w5, b5 = params[-2], params[-1]
    y = jnp.dot(x, w5.astype(jnp.bfloat16), preferred_element_type=jnp.float32) + b5
    return 1.0 / (1.0 + jnp.exp(-y))


# -----------------------------------------------------------------------------
if __name__ == "__main__":
    # Small shapes consistent with the module: noise is (n_samples, z_dim).
    N, Z_DIM, IM_DIM, HIDDEN_DIM = 8, 16, 64, 32

    key = jax.random.PRNGKey(0)
    key, knoise = jax.random.split(key)
    noise = jax.random.normal(knoise, (N, Z_DIM), jnp.float32)
    params = init_params(key, Z_DIM, IM_DIM, HIDDEN_DIM)

    out = jax.jit(generator_forward)(noise, params)
    out = jax.block_until_ready(out)
    assert out.shape == (N, IM_DIM)

    # Tight check against a reference that matches the kernel's bf16/f32 strategy.
    ref_matched = reference_forward_matched(noise, params)
    assert jnp.allclose(out, ref_matched, atol=5e-3, rtol=0.0), \
        "mismatch vs dtype-matched JAX reference"

    # Semantic check against the exact f32 PyTorch-equivalent reference
    # (tolerance loosened because the kernel uses bf16 matmul inputs).
    ref_f32 = reference_forward_f32(noise, params)
    assert jnp.allclose(out, ref_f32, atol=5e-2, rtol=0.0), \
        "mismatch vs f32 PyTorch-semantics reference"

    print("KERNEL_OK")
</pallas_src>

<mosaic_0001>
module attributes {stable_mosaic.version = 11 : i64} {
  func.func @generator_kernel(%arg0: memref<8x128xf32, #tpu.memory_space<vmem>>, %arg1: memref<128x128xbf16, #tpu.memory_space<vmem>>, %arg2: memref<128x128xbf16, #tpu.memory_space<vmem>>, %arg3: memref<128x128xbf16, #tpu.memory_space<vmem>>, %arg4: memref<128x256xbf16, #tpu.memory_space<vmem>>, %arg5: memref<256x128xbf16, #tpu.memory_space<vmem>>, %arg6: memref<9x256xf32, #tpu.memory_space<vmem>>, %arg7: memref<8x128xf32, #tpu.memory_space<vmem>>) attributes {dimension_semantics = [], scalar_prefetch = 0 : i64, scratch_operands = 0 : i64, tpu.core_type = #tpu.core_type<tc>} {
    %c0 = arith.constant 0 : index
    %c0_0 = arith.constant 0 : index
    %0 = vector.load %arg0[%c0, %c0_0] : memref<8x128xf32, #tpu.memory_space<vmem>>, vector<8x128xf32>
    %1 = arith.truncf %0 : vector<8x128xf32> to vector<8x128xbf16>
    %c0_1 = arith.constant 0 : index
    %c0_2 = arith.constant 0 : index
    %2 = vector.load %arg1[%c0_1, %c0_2] : memref<128x128xbf16, #tpu.memory_space<vmem>>, vector<128x128xbf16>
    %cst = arith.constant dense<0.000000e+00> : vector<8x128xf32>
    %3 = tpu.matmul %1, %2, %cst {dimension_numbers = #tpu.dot_dimension_numbers<[1], [0], [0], [1], [0, 0, 1, 1], [], []>} : vector<8x128xbf16>, vector<128x128xbf16>, vector<8x128xf32> -> vector<8x128xf32>
    %cst_3 = arith.constant dense<0.000000e+00> : vector<128xf32>
    %4 = vector.multi_reduction <add>, %3, %cst_3 [0] : vector<8x128xf32> to vector<128xf32>
    %5 = vector.shape_cast %4 : vector<128xf32> to vector<1x128xf32>
    %cst_4 = arith.constant 1.250000e-01 : f32
    %6 = vector.broadcast %cst_4 : f32 to vector<1x128xf32>
    %7 = arith.mulf %5, %6 : vector<1x128xf32>
    %8 = arith.mulf %3, %3 : vector<8x128xf32>
    %cst_5 = arith.constant dense<0.000000e+00> : vector<128xf32>
    %9 = vector.multi_reduction <add>, %8, %cst_5 [0] : vector<8x128xf32> to vector<128xf32>
    %10 = vector.shape_cast %9 : vector<128xf32> to vector<1x128xf32>
    %cst_6 = arith.constant 1.250000e-01 : f32
    %11 = vector.broadcast %cst_6 : f32 to vector<1x128xf32>
    %12 = arith.mulf %10, %11 : vector<1x128xf32>
    %13 = arith.mulf %7, %7 : vector<1x128xf32>
    %14 = arith.subf %12, %13 : vector<1x128xf32>
    %cst_7 = arith.constant 0.000000e+00 : f32
    %15 = vector.broadcast %cst_7 : f32 to vector<1x128xf32>
    %16 = arith.maximumf %14, %15 : vector<1x128xf32>
    %c0_8 = arith.constant 0 : index
    %c0_9 = arith.constant 0 : index
    %17 = vector.load %arg6[%c0_8, %c0_9] : memref<9x256xf32, #tpu.memory_space<vmem>>, vector<1x128xf32>
    %c1 = arith.constant 1 : index
    %c0_10 = arith.constant 0 : index
    %18 = vector.load %arg6[%c1, %c0_10] : memref<9x256xf32, #tpu.memory_space<vmem>>, vector<1x128xf32>
    %cst_11 = arith.constant 9.99999974E-6 : f32
    %19 = vector.broadcast %cst_11 : f32 to vector<1x128xf32>
    %20 = arith.addf %16, %19 : vector<1x128xf32>
    %21 = math.rsqrt %20 : vector<1x128xf32>
    %22 = arith.mulf %17, %21 : vector<1x128xf32>
    %23 = arith.mulf %7, %22 : vector<1x128xf32>
    %24 = arith.subf %18, %23 : vector<1x128xf32>
    %25 = vector.broadcast %22 : vector<1x128xf32> to vector<8x128xf32>
    %26 = arith.mulf %3, %25 : vector<8x128xf32>
    %27 = vector.broadcast %24 : vector<1x128xf32> to vector<8x128xf32>
    %28 = arith.addf %26, %27 : vector<8x128xf32>
    %cst_12 = arith.constant 0.000000e+00 : f32
    %29 = vector.broadcast %cst_12 : f32 to vector<8x128xf32>
    %30 = arith.maximumf %28, %29 : vector<8x128xf32>
    %31 = arith.truncf %30 : vector<8x128xf32> to vector<8x128xbf16>
    %c0_13 = arith.constant 0 : index
    %c0_14 = arith.constant 0 : index
    %32 = vector.load %arg2[%c0_13, %c0_14] : memref<128x128xbf16, #tpu.memory_space<vmem>>, vector<128x128xbf16>
    %cst_15 = arith.constant dense<0.000000e+00> : vector<8x128xf32>
    %33 = tpu.matmul %31, %32, %cst_15 {dimension_numbers = #tpu.dot_dimension_numbers<[1], [0], [0], [1], [0, 0, 1, 1], [], []>} : vector<8x128xbf16>, vector<128x128xbf16>, vector<8x128xf32> -> vector<8x128xf32>
    %cst_16 = arith.constant dense<0.000000e+00> : vector<128xf32>
    %34 = vector.multi_reduction <add>, %33, %cst_16 [0] : vector<8x128xf32> to vector<128xf32>
    %35 = vector.shape_cast %34 : vector<128xf32> to vector<1x128xf32>
    %cst_17 = arith.constant 1.250000e-01 : f32
    %36 = vector.broadcast %cst_17 : f32 to vector<1x128xf32>
    %37 = arith.mulf %35, %36 : vector<1x128xf32>
    %38 = arith.mulf %33, %33 : vector<8x128xf32>
    %cst_18 = arith.constant dense<0.000000e+00> : vector<128xf32>
    %39 = vector.multi_reduction <add>, %38, %cst_18 [0] : vector<8x128xf32> to vector<128xf32>
    %40 = vector.shape_cast %39 : vector<128xf32> to vector<1x128xf32>
    %cst_19 = arith.constant 1.250000e-01 : f32
    %41 = vector.broadcast %cst_19 : f32 to vector<1x128xf32>
    %42 = arith.mulf %40, %41 : vector<1x128xf32>
    %43 = arith.mulf %37, %37 : vector<1x128xf32>
    %44 = arith.subf %42, %43 : vector<1x128xf32>
    %cst_20 = arith.constant 0.000000e+00 : f32
    %45 = vector.broadcast %cst_20 : f32 to vector<1x128xf32>
    %46 = arith.maximumf %44, %45 : vector<1x128xf32>
    %c2 = arith.constant 2 : index
    %c0_21 = arith.constant 0 : index
    %47 = vector.load %arg6[%c2, %c0_21] : memref<9x256xf32, #tpu.memory_space<vmem>>, vector<1x128xf32>
    %c3 = arith.constant 3 : index
    %c0_22 = arith.constant 0 : index
    %48 = vector.load %arg6[%c3, %c0_22] : memref<9x256xf32, #tpu.memory_space<vmem>>, vector<1x128xf32>
    %cst_23 = arith.constant 9.99999974E-6 : f32
    %49 = vector.broadcast %cst_23 : f32 to vector<1x128xf32>
    %50 = arith.addf %46, %49 : vector<1x128xf32>
    %51 = math.rsqrt %50 : vector<1x128xf32>
    %52 = arith.mulf %47, %51 : vector<1x128xf32>
    %53 = arith.mulf %37, %52 : vector<1x128xf32>
    %54 = arith.subf %48, %53 : vector<1x128xf32>
    %55 = vector.broadcast %52 : vector<1x128xf32> to vector<8x128xf32>
    %56 = arith.mulf %33, %55 : vector<8x128xf32>
    %57 = vector.broadcast %54 : vector<1x128xf32> to vector<8x128xf32>
    %58 = arith.addf %56, %57 : vector<8x128xf32>
    %cst_24 = arith.constant 0.000000e+00 : f32
    %59 = vector.broadcast %cst_24 : f32 to vector<8x128xf32>
    %60 = arith.maximumf %58, %59 : vector<8x128xf32>
    %61 = arith.truncf %60 : vector<8x128xf32> to vector<8x128xbf16>
    %c0_25 = arith.constant 0 : index
    %c0_26 = arith.constant 0 : index
    %62 = vector.load %arg3[%c0_25, %c0_26] : memref<128x128xbf16, #tpu.memory_space<vmem>>, vector<128x128xbf16>
    %cst_27 = arith.constant dense<0.000000e+00> : vector<8x128xf32>
    %63 = tpu.matmul %61, %62, %cst_27 {dimension_numbers = #tpu.dot_dimension_numbers<[1], [0], [0], [1], [0, 0, 1, 1], [], []>} : vector<8x128xbf16>, vector<128x128xbf16>, vector<8x128xf32> -> vector<8x128xf32>
    %cst_28 = arith.constant dense<0.000000e+00> : vector<128xf32>
    %64 = vector.multi_reduction <add>, %63, %cst_28 [0] : vector<8x128xf32> to vector<128xf32>
    %65 = vector.shape_cast %64 : vector<128xf32> to vector<1x128xf32>
    %cst_29 = arith.constant 1.250000e-01 : f32
    %66 = vector.broadcast %cst_29 : f32 to vector<1x128xf32>
    %67 = arith.mulf %65, %66 : vector<1x128xf32>
    %68 = arith.mulf %63, %63 : vector<8x128xf32>
    %cst_30 = arith.constant dense<0.000000e+00> : vector<128xf32>
    %69 = vector.multi_reduction <add>, %68, %cst_30 [0] : vector<8x128xf32> to vector<128xf32>
    %70 = vector.shape_cast %69 : vector<128xf32> to vector<1x128xf32>
    %cst_31 = arith.constant 1.250000e-01 : f32
    %71 = vector.broadcast %cst_31 : f32 to vector<1x128xf32>
    %72 = arith.mulf %70, %71 : vector<1x128xf32>
    %73 = arith.mulf %67, %67 : vector<1x128xf32>
    %74 = arith.subf %72, %73 : vector<1x128xf32>
    %cst_32 = arith.constant 0.000000e+00 : f32
    %75 = vector.broadcast %cst_32 : f32 to vector<1x128xf32>
    %76 = arith.maximumf %74, %75 : vector<1x128xf32>
    %c4 = arith.constant 4 : index
    %c0_33 = arith.constant 0 : index
    %77 = vector.load %arg6[%c4, %c0_33] : memref<9x256xf32, #tpu.memory_space<vmem>>, vector<1x128xf32>
    %c5 = arith.constant 5 : index
    %c0_34 = arith.constant 0 : index
    %78 = vector.load %arg6[%c5, %c0_34] : memref<9x256xf32, #tpu.memory_space<vmem>>, vector<1x128xf32>
    %cst_35 = arith.constant 9.99999974E-6 : f32
    %79 = vector.broadcast %cst_35 : f32 to vector<1x128xf32>
    %80 = arith.addf %76, %79 : vector<1x128xf32>
    %81 = math.rsqrt %80 : vector<1x128xf32>
    %82 = arith.mulf %77, %81 : vector<1x128xf32>
    %83 = arith.mulf %67, %82 : vector<1x128xf32>
    %84 = arith.subf %78, %83 : vector<1x128xf32>
    %85 = vector.broadcast %82 : vector<1x128xf32> to vector<8x128xf32>
    %86 = arith.mulf %63, %85 : vector<8x128xf32>
    %87 = vector.broadcast %84 : vector<1x128xf32> to vector<8x128xf32>
    %88 = arith.addf %86, %87 : vector<8x128xf32>
    %cst_36 = arith.constant 0.000000e+00 : f32
    %89 = vector.broadcast %cst_36 : f32 to vector<8x128xf32>
    %90 = arith.maximumf %88, %89 : vector<8x128xf32>
    %91 = arith.truncf %90 : vector<8x128xf32> to vector<8x128xbf16>
    %c0_37 = arith.constant 0 : index
    %c0_38 = arith.constant 0 : index
    %92 = vector.load %arg4[%c0_37, %c0_38] : memref<128x256xbf16, #tpu.memory_space<vmem>>, vector<128x256xbf16>
    %cst_39 = arith.constant dense<0.000000e+00> : vector<8x256xf32>
    %93 = tpu.matmul %91, %92, %cst_39 {dimension_numbers = #tpu.dot_dimension_numbers<[1], [0], [0], [1], [0, 0, 1, 1], [], []>} : vector<8x128xbf16>, vector<128x256xbf16>, vector<8x256xf32> -> vector<8x256xf32>
    %cst_40 = arith.constant dense<0.000000e+00> : vector<256xf32>
    %94 = vector.multi_reduction <add>, %93, %cst_40 [0] : vector<8x256xf32> to vector<256xf32>
    %95 = vector.shape_cast %94 : vector<256xf32> to vector<1x256xf32>
    %cst_41 = arith.constant 1.250000e-01 : f32
    %96 = vector.broadcast %cst_41 : f32 to vector<1x256xf32>
    %97 = arith.mulf %95, %96 : vector<1x256xf32>
    %98 = arith.mulf %93, %93 : vector<8x256xf32>
    %cst_42 = arith.constant dense<0.000000e+00> : vector<256xf32>
    %99 = vector.multi_reduction <add>, %98, %cst_42 [0] : vector<8x256xf32> to vector<256xf32>
    %100 = vector.shape_cast %99 : vector<256xf32> to vector<1x256xf32>
    %cst_43 = arith.constant 1.250000e-01 : f32
    %101 = vector.broadcast %cst_43 : f32 to vector<1x256xf32>
    %102 = arith.mulf %100, %101 : vector<1x256xf32>
    %103 = arith.mulf %97, %97 : vector<1x256xf32>
    %104 = arith.subf %102, %103 : vector<1x256xf32>
    %cst_44 = arith.constant 0.000000e+00 : f32
    %105 = vector.broadcast %cst_44 : f32 to vector<1x256xf32>
    %106 = arith.maximumf %104, %105 : vector<1x256xf32>
    %c6 = arith.constant 6 : index
    %c0_45 = arith.constant 0 : index
    %107 = vector.load %arg6[%c6, %c0_45] : memref<9x256xf32, #tpu.memory_space<vmem>>, vector<1x256xf32>
    %c7 = arith.constant 7 : index
    %c0_46 = arith.constant 0 : index
    %108 = vector.load %arg6[%c7, %c0_46] : memref<9x256xf32, #tpu.memory_space<vmem>>, vector<1x256xf32>
    %cst_47 = arith.constant 9.99999974E-6 : f32
    %109 = vector.broadcast %cst_47 : f32 to vector<1x256xf32>
    %110 = arith.addf %106, %109 : vector<1x256xf32>
    %111 = math.rsqrt %110 : vector<1x256xf32>
    %112 = arith.mulf %107, %111 : vector<1x256xf32>
    %113 = arith.mulf %97, %112 : vector<1x256xf32>
    %114 = arith.subf %108, %113 : vector<1x256xf32>
    %115 = vector.broadcast %112 : vector<1x256xf32> to vector<8x256xf32>
    %116 = arith.mulf %93, %115 : vector<8x256xf32>
    %117 = vector.broadcast %114 : vector<1x256xf32> to vector<8x256xf32>
    %118 = arith.addf %116, %117 : vector<8x256xf32>
    %cst_48 = arith.constant 0.000000e+00 : f32
    %119 = vector.broadcast %cst_48 : f32 to vector<8x256xf32>
    %120 = arith.maximumf %118, %119 : vector<8x256xf32>
    %121 = arith.truncf %120 : vector<8x256xf32> to vector<8x256xbf16>
    %c0_49 = arith.constant 0 : index
    %c0_50 = arith.constant 0 : index
    %122 = vector.load %arg5[%c0_49, %c0_50] : memref<256x128xbf16, #tpu.memory_space<vmem>>, vector<256x128xbf16>
    %cst_51 = arith.constant dense<0.000000e+00> : vector<8x128xf32>
    %123 = tpu.matmul %121, %122, %cst_51 {dimension_numbers = #tpu.dot_dimension_numbers<[1], [0], [0], [1], [0, 0, 1, 1], [], []>} : vector<8x256xbf16>, vector<256x128xbf16>, vector<8x128xf32> -> vector<8x128xf32>
    %c8 = arith.constant 8 : index
    %c0_52 = arith.constant 0 : index
    %124 = vector.load %arg6[%c8, %c0_52] : memref<9x256xf32, #tpu.memory_space<vmem>>, vector<1x128xf32>
    %125 = vector.broadcast %124 : vector<1x128xf32> to vector<8x128xf32>
    %126 = arith.addf %123, %125 : vector<8x128xf32>
    %cst_53 = arith.constant 0.000000e+00 : f32
    %127 = vector.broadcast %cst_53 : f32 to vector<8x128xf32>
    %128 = arith.subf %127, %126 : vector<8x128xf32>
    %129 = math.exp %128 : vector<8x128xf32>
    %cst_54 = arith.constant 1.000000e+00 : f32
    %130 = vector.broadcast %cst_54 : f32 to vector<8x128xf32>
    %131 = arith.addf %130, %129 : vector<8x128xf32>
    %132 = tpu.reciprocal %131 {approx = true} : vector<8x128xf32> -> vector<8x128xf32>
    %c0_55 = arith.constant 0 : index
    %c0_56 = arith.constant 0 : index
    %133 = vector.load %arg7[%c0_55, %c0_56] : memref<8x128xf32, #tpu.memory_space<vmem>>, vector<8x128xf32>
    tpu.vector_store %arg7[%c0_55, %c0_56], %132 {strides = array<i32>} : memref<8x128xf32, #tpu.memory_space<vmem>>, vector<8x128xf32>,
    return
  }
}

</mosaic_0001>

<llo_original>
// kernel: generator_forward.1
$region0: #{generator_forward.1}
  #allocation0 [shape = 'u32[]', space=smem, size = 0x4, offset = 0x4, fixed_abs, tag = 'smem constant byte address 0x4 - core index']
  #allocation1 [shape = 'u32[72,128]{1,0:T(1,128)}', space=vmem, size = 0x9000, scoped, tag = 'internal scratch']
  %s0 = inlined_call_operand.vmem [shape: f32[8,128], index: 0, kind: input, shape index: {}]
  %s1 = inlined_call_operand.vmem [shape: bf16[128,128], index: 1, kind: input, shape index: {}]
  %s2 = inlined_call_operand.vmem [shape: bf16[128,128], index: 2, kind: input, shape index: {}]
  %s3 = inlined_call_operand.vmem [shape: bf16[128,128], index: 3, kind: input, shape index: {}]
  %s4 = inlined_call_operand.vmem [shape: bf16[128,256], index: 4, kind: input, shape index: {}]
  %s5 = inlined_call_operand.vmem [shape: bf16[256,128], index: 5, kind: input, shape index: {}]
  %s6 = inlined_call_operand.vmem [shape: f32[9,256], index: 6, kind: input, shape index: {}]
  %s7 = inlined_call_operand.hbm [shape: f32[8,128], index: 7, kind: output, shape index: {}]
  %s8 = sld [smem:[#allocation0]]
  $region38: #{generator_forward.1} parent=0
    _
  %s10 = ssub.s32 1, %s8
  %s11 = scalar_select 0, %s10, %s8
  $region1: #{generator_forward.1} parent=0
    #allocation2 [shape = 'u8[4096]{0}', space=vmem, size = 0x1000, scoped, tag = 'output window, operand 0, single buffered']
    #allocation3 [shape = 's32[1]{0}', space=sflag, size = 0x4, scoped, tag = 'scoped memory for generator_forward.1']
    %12 = vsyncpa [#allocation3], 0
    // Predicated region
    $region2: #{generator_forward.1} parent=1 // pred_check
      _
    $region3: #{generator_forward.1} parent=1 // pred_check_branch
      %14 = sbr.rel (0) target = $region5
    $region4: #{generator_forward.1} parent=1 // pred_region
      _
    $region5: #{generator_forward.1} parent=1 // pred_fallthru
      _
    // Predicated region
    $region6: #{generator_forward.1} parent=1 // pred_check
      _
    $region7: #{generator_forward.1} parent=1 // pred_check_branch
      %16 = sbr.rel (0) target = $region9
    $region8: #{generator_forward.1} parent=1 // pred_region
      _
    $region9: #{generator_forward.1} parent=1 // pred_fallthru
      _
    // Predicated region
    $region10: #{generator_forward.1} parent=1 // pred_check
      _
    $region11: #{generator_forward.1} parent=1 // pred_check_branch
      %18 = sbr.rel (0) target = $region13
    $region12: #{generator_forward.1} parent=1 // pred_region
      _
    $region13: #{generator_forward.1} parent=1 // pred_fallthru
      _
    // Predicated region
    $region14: #{generator_forward.1} parent=1 // pred_check
      _
    $region15: #{generator_forward.1} parent=1 // pred_check_branch
      %20 = sbr.rel (0) target = $region17
    $region16: #{generator_forward.1} parent=1 // pred_region
      _
    $region17: #{generator_forward.1} parent=1 // pred_fallthru
      _
    // Predicated region
    $region18: #{generator_forward.1} parent=1 // pred_check
      _
    $region19: #{generator_forward.1} parent=1 // pred_check_branch
      %22 = sbr.rel (0) target = $region21
    $region20: #{generator_forward.1} parent=1 // pred_region
      _
    $region21: #{generator_forward.1} parent=1 // pred_fallthru
      _
    // Predicated region
    $region22: #{generator_forward.1} parent=1 // pred_check
      _
    $region23: #{generator_forward.1} parent=1 // pred_check_branch
      %24 = sbr.rel (0) target = $region25
    $region24: #{generator_forward.1} parent=1 // pred_region
      _
    $region25: #{generator_forward.1} parent=1 // pred_fallthru
      _
    // Predicated region
    $region26: #{generator_forward.1} parent=1 // pred_check
      _
    $region27: #{generator_forward.1} parent=1 // pred_check_branch
      %26 = sbr.rel (0) target = $region29
    $region28: #{generator_forward.1} parent=1 // pred_region
      _
    $region29: #{generator_forward.1} parent=1 // pred_fallthru
      _
    %v27 = vld [vmem:[%s0] sm:$0xff]
    %v28 = vpack.c.bf16 %v27, %v27
    %v29 = vld [vmem:[%s1] sm:$0xf]
    %v30 = vld [vmem:[%s1 + $0x4] sm:$0xf]
    %v31 = vld [vmem:[%s1 + $0x8] sm:$0xf]
    %v32 = vld [vmem:[%s1 + $0xc] sm:$0xf]
    %v33 = vld [vmem:[%s1 + $0x10] sm:$0xf]
    %v34 = vld [vmem:[%s1 + $0x14] sm:$0xf]
    %v35 = vld [vmem:[%s1 + $0x18] sm:$0xf]
    %v36 = vld [vmem:[%s1 + $0x1c] sm:$0xf]
    %v37 = vld [vmem:[%s1 + $0x20] sm:$0xf]
    %v38 = vld [vmem:[%s1 + $0x24] sm:$0xf]
    %v39 = vld [vmem:[%s1 + $0x28] sm:$0xf]
    %v40 = vld [vmem:[%s1 + $0x2c] sm:$0xf]
    %v41 = vld [vmem:[%s1 + $0x30] sm:$0xf]
    %v42 = vld [vmem:[%s1 + $0x34] sm:$0xf]
    %v43 = vld [vmem:[%s1 + $0x38] sm:$0xf]
    %v44 = vld [vmem:[%s1 + $0x3c] sm:$0xf]
    %v61 = vunpack.c.l.b16 %v29
    %v62 = vunpack.c.l.b16 %v30
    %v63 = vunpack.c.l.b16 %v31
    %v64 = vunpack.c.l.b16 %v32
    %v65 = vunpack.c.l.b16 %v33
    %v66 = vunpack.c.l.b16 %v34
    %v67 = vunpack.c.l.b16 %v35
    %v68 = vunpack.c.l.b16 %v36
    %v69 = vunpack.c.l.b16 %v37
    %v70 = vunpack.c.l.b16 %v38
    %v71 = vunpack.c.l.b16 %v39
    %v72 = vunpack.c.l.b16 %v40
    %v73 = vunpack.c.l.b16 %v41
    %v74 = vunpack.c.l.b16 %v42
    %v75 = vunpack.c.l.b16 %v43
    %v76 = vunpack.c.l.b16 %v44
    %v77 = vpack.c.b16 %v62, %v61
    %v78 = vpack.c.b16 %v64, %v63
    %v79 = vpack.c.b16 %v66, %v65
    %v80 = vpack.c.b16 %v68, %v67
    %v81 = vpack.c.b16 %v70, %v69
    %v82 = vpack.c.b16 %v72, %v71
    %v83 = vpack.c.b16 %v74, %v73
    %v84 = vpack.c.b16 %v76, %v75
    %93 = vmatpush.bf16.msra.mxu0 %v84
    %94 = vmatpush.bf16.msra.mxu0 %v83
    %95 = vmatpush.bf16.msra.mxu0 %v82
    %96 = vmatpush.bf16.msra.mxu0 %v81
    %97 = vmatpush.bf16.msra.mxu0 %v80
    %98 = vmatpush.bf16.msra.mxu0 %v79
    %99 = vmatpush.bf16.msra.mxu0 %v78
    %100 = vmatpush.bf16.msra.mxu0 %v77
    %101 = vmatmul.bf16.gmra.mxu0 %v28
    %v102 = vpop.f32.mrf.mxu0
    %v103 = vadd.f32 0.0, %v102
    %v104 = vpop.f32.mrf.mxu0
    %105 = vdwg.mxu0
    %v106 = vrot.slane %v103, 4
    %v107 = vadd.f32 %v103, %v106
    %v108 = vrot.slane %v107, 2
    %v109 = vadd.f32 %v107, %v108
    %v110 = vrot.slane %v109, 1
    %v111 = vadd.f32 %v109, %v110
    %v112 = vmul.f32 %v111, 0.125
    %v113 = vmul.f32 %v103, %v103
    %v114 = vrot.slane %v113, 4
    %v115 = vadd.f32 %v113, %v114
    %v116 = vrot.slane %v115, 2
    %v117 = vadd.f32 %v115, %v116
    %v118 = vrot.slane %v117, 1
    %v119 = vadd.f32 %v117, %v118
    %v120 = vmul.f32 %v119, 0.125
    %v121 = vmul.f32 %v112, %v112
    %v122 = vsub.f32 %v120, %v121
    %v123 = vmax.f32 %v122, 0.0
    %v124 = vld [vmem:[%s6] ss:$0 sm:$0xff]
    %v125 = vld [vmem:[%s6 + $0x1] ss:$0 sm:$0xff]
    %v126 = vadd.f32 %v123, 1e-05
    %v127 = vrsqrt.pop %v126
    %v128 = vmul.f32 %v127, %v126
    %v129 = vmul.f32 %v128, %v127
    %v130 = vmul.f32 0.5, %v129
    %v131 = vsub.f32 1.5, %v130
    %v132 = vmul.f32 %v127, %v131
    %vm133 = vweird.f32 %v126
    %vm134 = vweird.f32 %v127
    %vm135 = vmor %vm133, %vm134
    %v136 = vsel %vm135, %v127, %v132
    %v137 = vmul.f32 %v124, %v136
    %v138 = vmul.f32 %v112, %v137
    %v139 = vsub.f32 %v125, %v138
    %v140 = vmul.f32 %v103, %v137
    %v141 = vadd.f32 %v140, %v139
    %v142 = vmax.f32 %v141, 0.0
    %v143 = vpack.c.bf16 %v142, %v142
    %v144 = vld [vmem:[%s2] sm:$0xf]
    %v145 = vld [vmem:[%s2 + $0x4] sm:$0xf]
    %v146 = vld [vmem:[%s2 + $0x8] sm:$0xf]
    %v147 = vld [vmem:[%s2 + $0xc] sm:$0xf]
    %v148 = vld [vmem:[%s2 + $0x10] sm:$0xf]
    %v149 = vld [vmem:[%s2 + $0x14] sm:$0xf]
    %v150 = vld [vmem:[%s2 + $0x18] sm:$0xf]
    %v151 = vld [vmem:[%s2 + $0x1c] sm:$0xf]
    %v152 = vld [vmem:[%s2 + $0x20] sm:$0xf]
    %v153 = vld [vmem:[%s2 + $0x24] sm:$0xf]
    %v154 = vld [vmem:[%s2 + $0x28] sm:$0xf]
    %v155 = vld [vmem:[%s2 + $0x2c] sm:$0xf]
    %v156 = vld [vmem:[%s2 + $0x30] sm:$0xf]
    %v157 = vld [vmem:[%s2 + $0x34] sm:$0xf]
    %v158 = vld [vmem:[%s2 + $0x38] sm:$0xf]
    %v159 = vld [vmem:[%s2 + $0x3c] sm:$0xf]
    %v176 = vunpack.c.l.b16 %v144
    %v177 = vunpack.c.l.b16 %v145
    %v178 = vunpack.c.l.b16 %v146
    %v179 = vunpack.c.l.b16 %v147
    %v180 = vunpack.c.l.b16 %v148
    %v181 = vunpack.c.l.b16 %v149
    %v182 = vunpack.c.l.b16 %v150
    %v183 = vunpack.c.l.b16 %v151
    %v184 = vunpack.c.l.b16 %v152
    %v185 = vunpack.c.l.b16 %v153
    %v186 = vunpack.c.l.b16 %v154
    %v187 = vunpack.c.l.b16 %v155
    %v188 = vunpack.c.l.b16 %v156
    %v189 = vunpack.c.l.b16 %v157
    %v190 = vunpack.c.l.b16 %v158
    %v191 = vunpack.c.l.b16 %v159
    %v192 = vpack.c.b16 %v177, %v176
    %v193 = vpack.c.b16 %v179, %v178
    %v194 = vpack.c.b16 %v181, %v180
    %v195 = vpack.c.b16 %v183, %v182
    %v196 = vpack.c.b16 %v185, %v184
    %v197 = vpack.c.b16 %v187, %v186
    %v198 = vpack.c.b16 %v189, %v188
    %v199 = vpack.c.b16 %v191, %v190
    %208 = vmatpush.bf16.msra.mxu0 %v199
    %209 = vmatpush.bf16.msra.mxu0 %v198
    %210 = vmatpush.bf16.msra.mxu0 %v197
    %211 = vmatpush.bf16.msra.mxu0 %v196
    %212 = vmatpush.bf16.msra.mxu0 %v195
    %213 = vmatpush.bf16.msra.mxu0 %v194
    %214 = vmatpush.bf16.msra.mxu0 %v193
    %215 = vmatpush.bf16.msra.mxu0 %v192
    %216 = vmatmul.bf16.gmra.mxu0 %v143
    %v217 = vpop.f32.mrf.mxu0
    %v218 = vadd.f32 0.0, %v217
    %v219 = vpop.f32.mrf.mxu0
    %220 = vdwg.mxu0
    %v221 = vrot.slane %v218, 4
    %v222 = vadd.f32 %v218, %v221
    %v223 = vrot.slane %v222, 2
    %v224 = vadd.f32 %v222, %v223
    %v225 = vrot.slane %v224, 1
    %v226 = vadd.f32 %v224, %v225
    %v227 = vmul.f32 %v226, 0.125
    %v228 = vmul.f32 %v218, %v218
    %v229 = vrot.slane %v228, 4
    %v230 = vadd.f32 %v228, %v229
    %v231 = vrot.slane %v230, 2
    %v232 = vadd.f32 %v230, %v231
    %v233 = vrot.slane %v232, 1
    %v234 = vadd.f32 %v232, %v233
    %v235 = vmul.f32 %v234, 0.125
    %v236 = vmul.f32 %v227, %v227
    %v237 = vsub.f32 %v235, %v236
    %v238 = vmax.f32 %v237, 0.0
    %v239 = vld [vmem:[%s6 + $0x2] ss:$0 sm:$0xff]
    %v240 = vld [vmem:[%s6 + $0x3] ss:$0 sm:$0xff]
    %v241 = vadd.f32 %v238, 1e-05
    %v242 = vrsqrt.pop %v241
    %v243 = vmul.f32 %v242, %v241
    %v244 = vmul.f32 %v243, %v242
    %v245 = vmul.f32 0.5, %v244
    %v246 = vsub.f32 1.5, %v245
    %v247 = vmul.f32 %v242, %v246
    %vm248 = vweird.f32 %v241
    %vm249 = vweird.f32 %v242
    %vm250 = vmor %vm248, %vm249
    %v251 = vsel %vm250, %v242, %v247
    %v252 = vmul.f32 %v239, %v251
    %v253 = vmul.f32 %v227, %v252
    %v254 = vsub.f32 %v240, %v253
    %v255 = vmul.f32 %v218, %v252
    %v256 = vadd.f32 %v255, %v254
    %v257 = vmax.f32 %v256, 0.0
    %v258 = vpack.c.bf16 %v257, %v257
    %v259 = vld [vmem:[%s3] sm:$0xf]
    %v260 = vld [vmem:[%s3 + $0x4] sm:$0xf]
    %v261 = vld [vmem:[%s3 + $0x8] sm:$0xf]
    %v262 = vld [vmem:[%s3 + $0xc] sm:$0xf]
    %v263 = vld [vmem:[%s3 + $0x10] sm:$0xf]
    %v264 = vld [vmem:[%s3 + $0x14] sm:$0xf]
    %v265 = vld [vmem:[%s3 + $0x18] sm:$0xf]
    %v266 = vld [vmem:[%s3 + $0x1c] sm:$0xf]
    %v267 = vld [vmem:[%s3 + $0x20] sm:$0xf]
    %v268 = vld [vmem:[%s3 + $0x24] sm:$0xf]
    %v269 = vld [vmem:[%s3 + $0x28] sm:$0xf]
    %v270 = vld [vmem:[%s3 + $0x2c] sm:$0xf]
    %v271 = vld [vmem:[%s3 + $0x30] sm:$0xf]
    %v272 = vld [vmem:[%s3 + $0x34] sm:$0xf]
    %v273 = vld [vmem:[%s3 + $0x38] sm:$0xf]
    %v274 = vld [vmem:[%s3 + $0x3c] sm:$0xf]
    %v291 = vunpack.c.l.b16 %v259
    %v292 = vunpack.c.l.b16 %v260
    %v293 = vunpack.c.l.b16 %v261
    %v294 = vunpack.c.l.b16 %v262
    %v295 = vunpack.c.l.b16 %v263
    %v296 = vunpack.c.l.b16 %v264
    %v297 = vunpack.c.l.b16 %v265
    %v298 = vunpack.c.l.b16 %v266
    %v299 = vunpack.c.l.b16 %v267
    %v300 = vunpack.c.l.b16 %v268
    %v301 = vunpack.c.l.b16 %v269
    %v302 = vunpack.c.l.b16 %v270
    %v303 = vunpack.c.l.b16 %v271
    %v304 = vunpack.c.l.b16 %v272
    %v305 = vunpack.c.l.b16 %v273
    %v306 = vunpack.c.l.b16 %v274
    %v307 = vpack.c.b16 %v292, %v291
    %v308 = vpack.c.b16 %v294, %v293
    %v309 = vpack.c.b16 %v296, %v295
    %v310 = vpack.c.b16 %v298, %v297
    %v311 = vpack.c.b16 %v300, %v299
    %v312 = vpack.c.b16 %v302, %v301
    %v313 = vpack.c.b16 %v304, %v303
    %v314 = vpack.c.b16 %v306, %v305
    %323 = vmatpush.bf16.msra.mxu0 %v314
    %324 = vmatpush.bf16.msra.mxu0 %v313
    %325 = vmatpush.bf16.msra.mxu0 %v312
    %326 = vmatpush.bf16.msra.mxu0 %v311
    %327 = vmatpush.bf16.msra.mxu0 %v310
    %328 = vmatpush.bf16.msra.mxu0 %v309
    %329 = vmatpush.bf16.msra.mxu0 %v308
    %330 = vmatpush.bf16.msra.mxu0 %v307
    %331 = vmatmul.bf16.gmra.mxu0 %v258
    %v332 = vpop.f32.mrf.mxu0
    %v333 = vadd.f32 0.0, %v332
    %v334 = vpop.f32.mrf.mxu0
    %335 = vdwg.mxu0
    %v336 = vrot.slane %v333, 4
    %v337 = vadd.f32 %v333, %v336
    %v338 = vrot.slane %v337, 2
    %v339 = vadd.f32 %v337, %v338
    %v340 = vrot.slane %v339, 1
    %v341 = vadd.f32 %v339, %v340
    %v342 = vmul.f32 %v341, 0.125
    %v343 = vmul.f32 %v333, %v333
    %v344 = vrot.slane %v343, 4
    %v345 = vadd.f32 %v343, %v344
    %v346 = vrot.slane %v345, 2
    %v347 = vadd.f32 %v345, %v346
    %v348 = vrot.slane %v347, 1
    %v349 = vadd.f32 %v347, %v348
    %v350 = vmul.f32 %v349, 0.125
    %v351 = vmul.f32 %v342, %v342
    %v352 = vsub.f32 %v350, %v351
    %v353 = vmax.f32 %v352, 0.0
    %v354 = vld [vmem:[%s6 + $0x4] ss:$0 sm:$0xff]
    %v355 = vld [vmem:[%s6 + $0x5] ss:$0 sm:$0xff]
    %v356 = vadd.f32 %v353, 1e-05
    %v357 = vrsqrt.pop %v356
    %v358 = vmul.f32 %v357, %v356
    %v359 = vmul.f32 %v358, %v357
    %v360 = vmul.f32 0.5, %v359
    %v361 = vsub.f32 1.5, %v360
    %v362 = vmul.f32 %v357, %v361
    %vm363 = vweird.f32 %v356
    %vm364 = vweird.f32 %v357
    %vm365 = vmor %vm363, %vm364
    %v366 = vsel %vm365, %v357, %v362
    %v367 = vmul.f32 %v354, %v366
    %v368 = vmul.f32 %v342, %v367
    %v369 = vsub.f32 %v355, %v368
    %v370 = vmul.f32 %v333, %v367
    %v371 = vadd.f32 %v370, %v369
    %v372 = vmax.f32 %v371, 0.0
    %v373 = vpack.c.bf16 %v372, %v372
    %v374 = vld [vmem:[%s4] sm:$0xff]
    %v375 = vld [vmem:[%s4 + $0x8] sm:$0xff]
    %v376 = vld [vmem:[%s4 + $0x10] sm:$0xff]
    %v377 = vld [vmem:[%s4 + $0x18] sm:$0xff]
    %v378 = vld [vmem:[%s4 + $0x20] sm:$0xff]
    %v379 = vld [vmem:[%s4 + $0x28] sm:$0xff]
    %v380 = vld [vmem:[%s4 + $0x30] sm:$0xff]
    %v381 = vld [vmem:[%s4 + $0x38] sm:$0xff]
    %v382 = vld [vmem:[%s4 + $0x40] sm:$0xff]
    %v383 = vld [vmem:[%s4 + $0x48] sm:$0xff]
    %v384 = vld [vmem:[%s4 + $0x50] sm:$0xff]
    %v385 = vld [vmem:[%s4 + $0x58] sm:$0xff]
    %v386 = vld [vmem:[%s4 + $0x60] sm:$0xff]
    %v387 = vld [vmem:[%s4 + $0x68] sm:$0xff]
    %v388 = vld [vmem:[%s4 + $0x70] sm:$0xff]
    %v389 = vld [vmem:[%s4 + $0x78] sm:$0xff]
    %v406 = vunpack.c.l.b16 %v374
    %v407 = vunpack.c.h.b16 %v374
    %v408 = vunpack.c.l.b16 %v375
    %v409 = vunpack.c.h.b16 %v375
    %v410 = vunpack.c.l.b16 %v376
    %v411 = vunpack.c.h.b16 %v376
    %v412 = vunpack.c.l.b16 %v377
    %v413 = vunpack.c.h.b16 %v377
    %v414 = vunpack.c.l.b16 %v378
    %v415 = vunpack.c.h.b16 %v378
    %v416 = vunpack.c.l.b16 %v379
    %v417 = vunpack.c.h.b16 %v379
    %v418 = vunpack.c.l.b16 %v380
    %v419 = vunpack.c.h.b16 %v380
    %v420 = vunpack.c.l.b16 %v381
    %v421 = vunpack.c.h.b16 %v381
    %v422 = vunpack.c.l.b16 %v382
    %v423 = vunpack.c.h.b16 %v382
    %v424 = vunpack.c.l.b16 %v383
    %v425 = vunpack.c.h.b16 %v383
    %v426 = vunpack.c.l.b16 %v384
    %v427 = vunpack.c.h.b16 %v384
    %v428 = vunpack.c.l.b16 %v385
    %v429 = vunpack.c.h.b16 %v385
    %v430 = vunpack.c.l.b16 %v386
    %v431 = vunpack.c.h.b16 %v386
    %v432 = vunpack.c.l.b16 %v387
    %v433 = vunpack.c.h.b16 %v387
    %v434 = vunpack.c.l.b16 %v388
    %v435 = vunpack.c.h.b16 %v388
    %v436 = vunpack.c.l.b16 %v389
    %v437 = vunpack.c.h.b16 %v389
    %v438 = vpack.c.b16 %v408, %v406
    %v439 = vpack.c.b16 %v409, %v407
    %v440 = vpack.c.b16 %v412, %v410
    %v441 = vpack.c.b16 %v413, %v411
    %v442 = vpack.c.b16 %v416, %v414
    %v443 = vpack.c.b16 %v417, %v415
    %v444 = vpack.c.b16 %v420, %v418
    %v445 = vpack.c.b16 %v421, %v419
    %v446 = vpack.c.b16 %v424, %v422
    %v447 = vpack.c.b16 %v425, %v423
    %v448 = vpack.c.b16 %v428, %v426
    %v449 = vpack.c.b16 %v429, %v427
    %v450 = vpack.c.b16 %v432, %v430
    %v451 = vpack.c.b16 %v433, %v431
    %v452 = vpack.c.b16 %v436, %v434
    %v453 = vpack.c.b16 %v437, %v435
    %470 = vmatpush.bf16.msra.mxu0 %v452
    %471 = vmatpush.bf16.msra.mxu0 %v450
    %472 = vmatpush.bf16.msra.mxu0 %v448
    %473 = vmatpush.bf16.msra.mxu0 %v446
    %474 = vmatpush.bf16.msra.mxu0 %v444
    %475 = vmatpush.bf16.msra.mxu0 %v442
    %476 = vmatpush.bf16.msra.mxu0 %v440
    %477 = vmatpush.bf16.msra.mxu0 %v438
    %478 = vmatmul.bf16.gmra.mxu0 %v373
    %v479 = vpop.f32.mrf.mxu0
    %v480 = vadd.f32 0.0, %v479
    %v481 = vpop.f32.mrf.mxu0
    %482 = vdwg.mxu0
    %483 = vmatpush.bf16.msra.mxu0 %v453
    %484 = vmatpush.bf16.msra.mxu0 %v451
    %485 = vmatpush.bf16.msra.mxu0 %v449
    %486 = vmatpush.bf16.msra.mxu0 %v447
    %487 = vmatpush.bf16.msra.mxu0 %v445
    %488 = vmatpush.bf16.msra.mxu0 %v443
    %489 = vmatpush.bf16.msra.mxu0 %v441
    %490 = vmatpush.bf16.msra.mxu0 %v439
    %491 = vmatmul.bf16.gmra.mxu0 %v373
    %v492 = vpop.f32.mrf.mxu0
    %v493 = vadd.f32 0.0, %v492
    %v494 = vpop.f32.mrf.mxu0
    %495 = vdwg.mxu0
    %v496 = vrot.slane %v480, 4
    %v497 = vadd.f32 %v480, %v496
    %v498 = vrot.slane %v497, 2
    %v499 = vadd.f32 %v497, %v498
    %v500 = vrot.slane %v499, 1
    %v501 = vadd.f32 %v499, %v500
    %v502 = vrot.slane %v493, 4
    %v503 = vadd.f32 %v493, %v502
    %v504 = vrot.slane %v503, 2
    %v505 = vadd.f32 %v503, %v504
    %v506 = vrot.slane %v505, 1
    %v507 = vadd.f32 %v505, %v506
    %v508 = vmul.f32 %v501, 0.125
    %v509 = vmul.f32 %v507, 0.125
    %v510 = vmul.f32 %v480, %v480
    %v511 = vmul.f32 %v493, %v493
    %v512 = vrot.slane %v510, 4
    %v513 = vadd.f32 %v510, %v512
    %v514 = vrot.slane %v513, 2
    %v515 = vadd.f32 %v513, %v514
    %v516 = vrot.slane %v515, 1
    %v517 = vadd.f32 %v515, %v516
    %v518 = vrot.slane %v511, 4
    %v519 = vadd.f32 %v511, %v518
    %v520 = vrot.slane %v519, 2
    %v521 = vadd.f32 %v519, %v520
    %v522 = vrot.slane %v521, 1
    %v523 = vadd.f32 %v521, %v522
    %v524 = vmul.f32 %v517, 0.125
    %v525 = vmul.f32 %v523, 0.125
    %v526 = vmul.f32 %v508, %v508
    %v527 = vmul.f32 %v509, %v509
    %v528 = vsub.f32 %v524, %v526
    %v529 = vsub.f32 %v525, %v527
    %v530 = vmax.f32 %v528, 0.0
    %v531 = vmax.f32 %v529, 0.0
    %s532 = scalar_lea.vmem %s6, 6
    %v533 = vld [vmem:[%s532] ss:$8 sm:$0x3]
    %s534 = scalar_lea.vmem %s6, 7
    %v535 = vld [vmem:[%s534] ss:$8 sm:$0x3]
    %v536 = vadd.f32 %v530, 1e-05
    %v537 = vadd.f32 %v531, 1e-05
    %v538 = vrsqrt.pop %v536
    %v539 = vmul.f32 %v538, %v536
    %v540 = vmul.f32 %v539, %v538
    %v541 = vmul.f32 0.5, %v540
    %v542 = vsub.f32 1.5, %v541
    %v543 = vmul.f32 %v538, %v542
    %vm544 = vweird.f32 %v536
    %vm545 = vweird.f32 %v538
    %vm546 = vmor %vm544, %vm545
    %v547 = vsel %vm546, %v538, %v543
    %v548 = vrsqrt.pop %v537
    %v549 = vmul.f32 %v548, %v537
    %v550 = vmul.f32 %v549, %v548
    %v551 = vmul.f32 0.5, %v550
    %v552 = vsub.f32 1.5, %v551
    %v553 = vmul.f32 %v548, %v552
    %vm554 = vweird.f32 %v537
    %vm555 = vweird.f32 %v548
    %vm556 = vmor %vm554, %vm555
    %v557 = vsel %vm556, %v548, %v553
    %v560 = vrot.slane %v557, 7
    %vm561 = vcmask 1040384
    %v562 = vsel %vm561, %v547, %v560
    %v564 = vmul.f32 %v533, %v562
    %v566 = vperm.slane %v564, 0
    %v567 = vperm.slane %v564, 1
    %v570 = vmul.f32 %v508, %v566
    %v571 = vmul.f32 %v509, %v567
    %v574 = vrot.slane %v571, 7
    %v575 = vsel %vm561, %v570, %v574
    %v577 = vsub.f32 %v535, %v575
    %v578 = vmul.f32 %v480, %v566
    %v579 = vmul.f32 %v493, %v567
    %v581 = vperm.slane %v577, 0
    %v582 = vperm.slane %v577, 1
    %v585 = vadd.f32 %v578, %v581
    %v586 = vadd.f32 %v579, %v582
    %v587 = vmax.f32 %v585, 0.0
    %v588 = vmax.f32 %v586, 0.0
    %v589 = vpack.c.bf16 %v587, %v587
    %v590 = vpack.c.bf16 %v588, %v588
    %v591 = vld [vmem:[%s5] sm:$0xf]
    %v592 = vld [vmem:[%s5 + $0x4] sm:$0xf]
    %v593 = vld [vmem:[%s5 + $0x8] sm:$0xf]
    %v594 = vld [vmem:[%s5 + $0xc] sm:$0xf]
    %v595 = vld [vmem:[%s5 + $0x10] sm:$0xf]
    %v596 = vld [vmem:[%s5 + $0x14] sm:$0xf]
    %v597 = vld [vmem:[%s5 + $0x18] sm:$0xf]
    %v598 = vld [vmem:[%s5 + $0x1c] sm:$0xf]
    %v599 = vld [vmem:[%s5 + $0x20] sm:$0xf]
    %v600 = vld [vmem:[%s5 + $0x24] sm:$0xf]
    %v601 = vld [vmem:[%s5 + $0x28] sm:$0xf]
    %v602 = vld [vmem:[%s5 + $0x2c] sm:$0xf]
    %v603 = vld [vmem:[%s5 + $0x30] sm:$0xf]
    %v604 = vld [vmem:[%s5 + $0x34] sm:$0xf]
    %v605 = vld [vmem:[%s5 + $0x38] sm:$0xf]
    %v606 = vld [vmem:[%s5 + $0x3c] sm:$0xf]
    %v607 = vld [vmem:[%s5 + $0x40] sm:$0xf]
    %v608 = vld [vmem:[%s5 + $0x44] sm:$0xf]
    %v609 = vld [vmem:[%s5 + $0x48] sm:$0xf]
    %v610 = vld [vmem:[%s5 + $0x4c] sm:$0xf]
    %v611 = vld [vmem:[%s5 + $0x50] sm:$0xf]
    %v612 = vld [vmem:[%s5 + $0x54] sm:$0xf]
    %v613 = vld [vmem:[%s5 + $0x58] sm:$0xf]
    %v614 = vld [vmem:[%s5 + $0x5c] sm:$0xf]
    %v615 = vld [vmem:[%s5 + $0x60] sm:$0xf]
    %v616 = vld [vmem:[%s5 + $0x64] sm:$0xf]
    %v617 = vld [vmem:[%s5 + $0x68] sm:$0xf]
    %v618 = vld [vmem:[%s5 + $0x6c] sm:$0xf]
    %v619 = vld [vmem:[%s5 + $0x70] sm:$0xf]
    %v620 = vld [vmem:[%s5 + $0x74] sm:$0xf]
    %v621 = vld [vmem:[%s5 + $0x78] sm:$0xf]
    %v622 = vld [vmem:[%s5 + $0x7c] sm:$0xf]
    %v623 = vld [vmem:[%s6 + $0x10] ss:$0 sm:$0xff]
    %v656 = vunpack.c.l.b16 %v591
    %v657 = vunpack.c.l.b16 %v592
    %v658 = vunpack.c.l.b16 %v593
    %v659 = vunpack.c.l.b16 %v594
    %v660 = vunpack.c.l.b16 %v595
    %v661 = vunpack.c.l.b16 %v596
    %v662 = vunpack.c.l.b16 %v597
    %v663 = vunpack.c.l.b16 %v598
    %v664 = vunpack.c.l.b16 %v599
    %v665 = vunpack.c.l.b16 %v600
    %v666 = vunpack.c.l.b16 %v601
    %v667 = vunpack.c.l.b16 %v602
    %v668 = vunpack.c.l.b16 %v603
    %v669 = vunpack.c.l.b16 %v604
    %v670 = vunpack.c.l.b16 %v605
    %v671 = vunpack.c.l.b16 %v606
    %v672 = vunpack.c.l.b16 %v607
    %v673 = vunpack.c.l.b16 %v608
    %v674 = vunpack.c.l.b16 %v609
    %v675 = vunpack.c.l.b16 %v610
    %v676 = vunpack.c.l.b16 %v611
    %v677 = vunpack.c.l.b16 %v612
    %v678 = vunpack.c.l.b16 %v613
    %v679 = vunpack.c.l.b16 %v614
    %v680 = vunpack.c.l.b16 %v615
    %v681 = vunpack.c.l.b16 %v616
    %v682 = vunpack.c.l.b16 %v617
    %v683 = vunpack.c.l.b16 %v618
    %v684 = vunpack.c.l.b16 %v619
    %v685 = vunpack.c.l.b16 %v620
    %v686 = vunpack.c.l.b16 %v621
    %v687 = vunpack.c.l.b16 %v622
    %v688 = vpack.c.b16 %v657, %v656
    %v689 = vpack.c.b16 %v659, %v658
    %v690 = vpack.c.b16 %v661, %v660
    %v691 = vpack.c.b16 %v663, %v662
    %v692 = vpack.c.b16 %v665, %v664
    %v693 = vpack.c.b16 %v667, %v666
    %v694 = vpack.c.b16 %v669, %v668
    %v695 = vpack.c.b16 %v671, %v670
    %v696 = vpack.c.b16 %v673, %v672
    %v697 = vpack.c.b16 %v675, %v674
    %v698 = vpack.c.b16 %v677, %v676
    %v699 = vpack.c.b16 %v679, %v678
    %v700 = vpack.c.b16 %v681, %v680
    %v701 = vpack.c.b16 %v683, %v682
    %v702 = vpack.c.b16 %v685, %v684
    %v703 = vpack.c.b16 %v687, %v686
    %720 = vmatpush.bf16.msra.mxu0 %v695
    %721 = vmatpush.bf16.msra.mxu0 %v694
    %722 = vmatpush.bf16.msra.mxu0 %v693
    %723 = vmatpush.bf16.msra.mxu0 %v692
    %724 = vmatpush.bf16.msra.mxu0 %v691
    %725 = vmatpush.bf16.msra.mxu0 %v690
    %726 = vmatpush.bf16.msra.mxu0 %v689
    %727 = vmatpush.bf16.msra.mxu0 %v688
    %728 = vmatmul.bf16.gmra.mxu0 %v589
    %v729 = vpop.f32.mrf.mxu0
    %v730 = vadd.f32 %v623, %v729
    %v731 = vpop.f32.mrf.mxu0
    %732 = vdwg.mxu0
    %733 = vmatpush.bf16.msra.mxu0 %v703
    %734 = vmatpush.bf16.msra.mxu0 %v702
    %735 = vmatpush.bf16.msra.mxu0 %v701
    %736 = vmatpush.bf16.msra.mxu0 %v700
    %737 = vmatpush.bf16.msra.mxu0 %v699
    %738 = vmatpush.bf16.msra.mxu0 %v698
    %739 = vmatpush.bf16.msra.mxu0 %v697
    %740 = vmatpush.bf16.msra.mxu0 %v696
    %741 = vmatmul.bf16.gmra.mxu0 %v590
    %v742 = vpop.f32.mrf.mxu0
    %v743 = vadd.f32 %v730, %v742
    %v744 = vpop.f32.mrf.mxu0
    %745 = vdwg.mxu0
    %v746 = vsub.f32 0.0, %v743
    %v747 = vmul.f32 %v746, 1.442695
    %v748 = vpow.pop %v747
    %v749 = vadd.f32 %v748, 1.0
    %v750 = vrcp.pop %v749
    %751 = vst [vmem:[#allocation2] sm:$0xff] %v750
    // Predicated region
    $region30: #{generator_forward.1} parent=1 // pred_check
      _
    $region31: #{generator_forward.1} parent=1 // pred_check_branch
      %753 = sbr.rel (0) target = $region33
    $region32: #{generator_forward.1} parent=1 // pred_region
      %755 = vsyncadd [#allocation3], 0
      %s757 = sshll.u32 [#allocation2], 4
      %s758 = int_to_ptr.vmem [resolvable:$true] %s757
      %s759 = sshll.u32 %s7, 4
      %s760 = int_to_ptr.hbm [resolvable:$true] %s759
      %762 = dma.vmem_to_hbm [thread:$0]  %s758, 128, %s760, [#allocation3]
    $region33: #{generator_forward.1} parent=1 // pred_fallthru
      _
    // Predicated region
    $region34: #{generator_forward.1} parent=1 // pred_check
      _
    $region35: #{generator_forward.1} parent=1 // pred_check_branch
      %764 = sbr.rel (0) target = $region37
    $region36: #{generator_forward.1} parent=1 // pred_region
      %766 = dma.done [#allocation3], 128
    $region37: #{generator_forward.1} parent=1 // pred_fallthru
      _
    %767 = vsyncpa [#allocation3], 1

</llo_original>
